<compile_context>
chip_gen: v5e
topology: v5e:2x2
jax: 0.10.0
libtpu: 0.0.40
codegen_flags: <defaults>
</compile_context>

<pallas_src>
import jax
import jax.numpy as jnp
from jax.experimental import pallas as pl
from jax.experimental.pallas import tpu as pltpu

_LANE = 128
_MIN_SUBLANES = {4: 8, 2: 16, 1: 32}      # sublane packing tile per itemsize
_SINGLE_BLOCK_BYTES = 2 * 1024 * 1024     # below this, one block / one grid step
_TILE_BYTES = 2 * 1024 * 1024             # ~2 MiB per buffer on the tiled path
_JNP_THRESHOLD = 16 * 1024                # below this, fused XLA elementwise wins


def _conv1x1_tanh_kernel(wb_ref, x_ref, o_ref):
    # wb_ref: SMEM f32[2] = [weight, bias]; x_ref / o_ref: VMEM (block_rows, cols)
    w = wb_ref[0]
    b = wb_ref[1]
    # Compute in f32 (safe on v5e which lacks bf16 VPU/EUP paths); cast back on store.
    x = x_ref[...].astype(jnp.float32)
    o_ref[...] = jnp.tanh(x * w + b).astype(o_ref.dtype)


def _choose_layout(total, itemsize):
    """Pick (cols, rows_padded, block_rows) for a lane-dense 2-D repacking."""
    min_sub = _MIN_SUBLANES.get(itemsize, 8)

    # 1) Lane width: prefer a multiple of 128 that divides `total` exactly with
    #    a min_sub-aligned row count -> no pad / slice HBM copies at all.
    cols = None
    for cand in (2048, 1024, 512, 256, _LANE):
        if total % cand == 0 and (total // cand) % min_sub == 0:
            cols = cand
            break
    exact = cols is not None
    if not exact:
        cols = _LANE if total * itemsize <= _SINGLE_BLOCK_BYTES else 4 * _LANE
    rows = -(-total // cols)

    # Largest row-block (multiple of min_sub) keeping one buffer <= ~2 MiB.
    max_block_rows = max(
        min_sub, (_TILE_BYTES // (cols * itemsize)) // min_sub * min_sub
    )

    if rows <= max_block_rows:
        # Whole (padded) array as one block: single grid step, no per-step
        # overhead; block_shape == full array dims so no (8,128) divisibility issue.
        rows_padded = rows if exact else -(-rows // min_sub) * min_sub
        return cols, rows_padded, rows_padded

    if exact:
        # Largest divisor of rows that is a multiple of min_sub and fits the
        # VMEM budget -> large exact arrays are tiled without any padding.
        block_rows = min_sub
        d = max_block_rows
        while d >= min_sub:
            if rows % d == 0:
                block_rows = d
                break
            d -= min_sub
        return cols, rows, block_rows

    block_rows = max_block_rows
    rows_padded = -(-rows // block_rows) * block_rows
    return cols, rows_padded, block_rows


def model_tanh_forward(x_nchw, weight, bias):
    """x_nchw: (N, 1, H, W); weight: (1, 1, 1, 1); bias: (1,)."""
    n, c, h, w = x_nchw.shape
    assert c == 1 and weight.shape == (1, 1, 1, 1) and bias.shape == (1,)

    total = n * c * h * w
    w0 = weight[0, 0, 0, 0]
    b0 = bias[0]

    # Tiny inputs: pallas_call dispatch dominates; let XLA fuse the elementwise op.
    if total < _JNP_THRESHOLD:
        return jnp.tanh(x_nchw.astype(jnp.float32) * w0 + b0).astype(x_nchw.dtype)

    itemsize = jnp.dtype(x_nchw.dtype).itemsize
    cols, rows_padded, block_rows = _choose_layout(total, itemsize)
    padded_total = rows_padded * cols

    flat = x_nchw.reshape(-1)
    if padded_total != total:
        flat = jnp.pad(flat, (0, padded_total - total))
    x2d = flat.reshape(rows_padded, cols)

    wb = jnp.stack([w0, b0]).astype(jnp.float32)

    grid = (rows_padded // block_rows,)

    out2d = pl.pallas_call(
        _conv1x1_tanh_kernel,
        out_shape=jax.ShapeDtypeStruct((rows_padded, cols), x_nchw.dtype),
        grid=grid,
        in_specs=[
            pl.BlockSpec(memory_space=pltpu.MemorySpace.SMEM),   # [w, b] scalars
            pl.BlockSpec((block_rows, cols), lambda i: (i, 0)),  # x tile
        ],
        out_specs=pl.BlockSpec((block_rows, cols), lambda i: (i, 0)),
        compiler_params=pltpu.CompilerParams(
            # 1 TC on v5e/v6e (no-op there); shards grid steps across the two
            # TensorCores on v7x for the tiled (multi-step) path.
            dimension_semantics=("parallel",),
        ),
        cost_estimate=pl.CostEstimate(
            flops=2 * padded_total,
            transcendentals=padded_total,
            bytes_accessed=2 * padded_total * itemsize,
        ),
    )(wb, x2d)

    out = out2d.reshape(-1)
    if padded_total != total:
        out = out[:total]
    return out.reshape(n, c, h, w)


if __name__ == "__main__":
    key = jax.random.PRNGKey(0)
    kx, kw, kb, kx2, kx3, kx4 = jax.random.split(key, 6)

    # Conv2d(1, 1, 1) params (PyTorch default init: U(-1/sqrt(fan_in), 1/sqrt(fan_in)),
    # fan_in = 1*1*1 = 1 -> U(-1, 1)).
    weight = jax.random.uniform(kw, (1, 1, 1, 1), minval=-1.0, maxval=1.0, dtype=jnp.float32)
    bias = jax.random.uniform(kb, (1,), minval=-1.0, maxval=1.0, dtype=jnp.float32)

    def ref_fn(x):
        return jnp.tanh(x * weight[0, 0, 0, 0] + bias[0])

    # 1) The module's own input: x1 = torch.randn(1, 1, 3, 3)  -> jnp fast path.
    x_small = jax.random.normal(kx, (1, 1, 3, 3), dtype=jnp.float32)
    y_small = jax.block_until_ready(model_tanh_forward(x_small, weight, bias))
    assert y_small.shape == (1, 1, 3, 3)
    assert jnp.allclose(y_small, ref_fn(x_small), atol=1e-5, rtol=1e-5)

    # 2) Medium, exactly divisible -> single-block pallas path (grid=(1,), no padding).
    x_med = jax.random.normal(kx2, (2, 1, 128, 128), dtype=jnp.float32)
    y_med = jax.block_until_ready(model_tanh_forward(x_med, weight, bias))
    assert y_med.shape == x_med.shape
    assert jnp.allclose(y_med, ref_fn(x_med), atol=1e-5, rtol=1e-5)

    # 3) Ragged shape -> padded single-block path.
    x_rag = jax.random.normal(kx3, (1, 1, 157, 213), dtype=jnp.float32)
    y_rag = jax.block_until_ready(model_tanh_forward(x_rag, weight, bias))
    assert y_rag.shape == x_rag.shape
    assert jnp.allclose(y_rag, ref_fn(x_rag), atol=1e-5, rtol=1e-5)

    # 4) Larger input -> tiled multi-step grid ("parallel" axis), no padding.
    x_big = jax.random.normal(kx4, (2, 1, 512, 1024), dtype=jnp.float32)
    y_big = jax.block_until_ready(model_tanh_forward(x_big, weight, bias))
    assert y_big.shape == x_big.shape
    assert jnp.allclose(y_big, ref_fn(x_big), atol=1e-5, rtol=1e-5)

    print("KERNEL_OK")
</pallas_src>

<mosaic_0001>
module attributes {stable_mosaic.version = 11 : i64} {
  func.func @_conv1x1_tanh_kernel(%arg0: i32, %arg1: memref<2xf32, #tpu.memory_space<smem>>, %arg2: memref<16x2048xf32, #tpu.memory_space<vmem>>, %arg3: memref<16x2048xf32, #tpu.memory_space<vmem>>) attributes {dimension_semantics = [#tpu.dimension_semantics<parallel>], iteration_bounds = array<i64: 1>, scalar_prefetch = 0 : i64, scratch_operands = 0 : i64, tpu.core_type = #tpu.core_type<tc>, window_params = [{transform_indices = @transform_0, window_bounds = array<i64: 2>}, {transform_indices = @transform_1, window_bounds = array<i64: 16, 2048>}, {transform_indices = @transform_2, window_bounds = array<i64: 16, 2048>}]} {
    %c0 = arith.constant 0 : index
    %0 = memref.load %arg1[%c0] : memref<2xf32, #tpu.memory_space<smem>>
    %c1 = arith.constant 1 : index
    %1 = memref.load %arg1[%c1] : memref<2xf32, #tpu.memory_space<smem>>
    %c0_0 = arith.constant 0 : index
    %c0_1 = arith.constant 0 : index
    %2 = vector.load %arg2[%c0_0, %c0_1] : memref<16x2048xf32, #tpu.memory_space<vmem>>, vector<16x2048xf32>
    %3 = vector.broadcast %0 : f32 to vector<16x2048xf32>
    %4 = arith.mulf %2, %3 : vector<16x2048xf32>
    %5 = vector.broadcast %1 : f32 to vector<16x2048xf32>
    %6 = arith.addf %4, %5 : vector<16x2048xf32>
    %7 = math.tanh %6 : vector<16x2048xf32>
    %c0_2 = arith.constant 0 : index
    %c0_3 = arith.constant 0 : index
    %8 = vector.load %arg3[%c0_2, %c0_3] : memref<16x2048xf32, #tpu.memory_space<vmem>>, vector<16x2048xf32>
    tpu.vector_store %arg3[%c0_2, %c0_3], %7 {strides = array<i32>} : memref<16x2048xf32, #tpu.memory_space<vmem>>, vector<16x2048xf32>,
    return
  }
  func.func @transform_0(%arg0: i32) -> i32 {
    %c0_i32 = arith.constant 0 : i32
    %c0_i32_0 = arith.constant 0 : i32
    return %c0_i32 : i32
  }
  func.func @transform_1(%arg0: i32) -> (i32, i32) {
    %c0_i32 = arith.constant 0 : i32
    %c0_i32_0 = arith.constant 0 : i32
    return %arg0, %c0_i32 : i32, i32
  }
  func.func @transform_2(%arg0: i32) -> (i32, i32) {
    %c0_i32 = arith.constant 0 : i32
    %c0_i32_0 = arith.constant 0 : i32
    return %arg0, %c0_i32 : i32, i32
  }
}

</mosaic_0001>

<llo_original>
// kernel: tpu_custom_call.1
$region0: #{tpu_custom_call.1}
  #allocation0 [shape = 'u32[]', space=smem, size = 0x4, offset = 0x4, fixed_abs, tag = 'smem constant byte address 0x4 - core index']
  #allocation1 [shape = 'u32[72,128]{1,0:T(1,128)}', space=vmem, size = 0x9000, scoped, tag = 'internal scratch']
  %s0 = inlined_call_operand.hbm [shape: f32[2], index: 0, kind: input, shape index: {}]
  %s1 = inlined_call_operand.hbm [shape: f32[16,2048], index: 1, kind: input, shape index: {}]
  %s2 = inlined_call_operand.hbm [shape: f32[16,2048], index: 2, kind: output, shape index: {}]
  %s3 = sld [smem:[#allocation0]]
  $region26: #{tpu_custom_call.1} parent=0
    _
  %s5 = ssub.s32 1, %s3
  %s6 = scalar_select 0, %s5, %s3
  $region1: #{tpu_custom_call.1} parent=0
    #allocation2 [shape = 'u8[512]{0}', space=smem, size = 0x200, scoped, tag = 'input window, operand 0, single buffered']
    #allocation3 [shape = 's32[1]{0}', space=sflag, size = 0x4, scoped, tag = 'scoped memory for tpu_custom_call.1']
    #allocation4 [shape = 's32[1]{0}', space=sflag, size = 0x4, scoped, tag = 'scoped memory for tpu_custom_call.1']
    #allocation5 [shape = 's32[1]{0}', space=sflag, size = 0x4, scoped, tag = 'scoped memory for tpu_custom_call.1']
    #allocation6 [shape = 'u8[131072]{0}', space=vmem, size = 0x20000, scoped, tag = 'input window, operand 1, single buffered']
    #allocation7 [shape = 'u8[131072]{0}', space=vmem, size = 0x20000, scoped, tag = 'output window, operand 0, single buffered']
    %7 = vsyncpa [#allocation5], 0
    %8 = vsyncpa [#allocation3], 0
    %9 = vsyncpa [#allocation4], 0
    // Predicated region
    $region2: #{tpu_custom_call.1} parent=1 // pred_check
      _
    $region3: #{tpu_custom_call.1} parent=1 // pred_check_branch
      %11 = sbr.rel (0) target = $region5
    $region4: #{tpu_custom_call.1} parent=1 // pred_region
      %13 = vsyncadd [#allocation5], 0
      %s15 = sshll.u32 %s0, 4
      %s16 = int_to_ptr.hbm [resolvable:$true] %s15
      %18 = dma.hbm_to_smem %s16, 16, [#allocation2], [#allocation5]
    $region5: #{tpu_custom_call.1} parent=1 // pred_fallthru
      _
    // Predicated region
    $region6: #{tpu_custom_call.1} parent=1 // pred_check
      _
    $region7: #{tpu_custom_call.1} parent=1 // pred_check_branch
      %20 = sbr.rel (0) target = $region9
    $region8: #{tpu_custom_call.1} parent=1 // pred_region
      %22 = vsyncadd [#allocation3], 0
      %s23 = sshll.u32 %s1, 4
      %s24 = int_to_ptr.hbm [resolvable:$true] %s23
      %s25 = sshll.u32 [#allocation6], 4
      %s26 = int_to_ptr.vmem [resolvable:$true] %s25
      %31 = dma.hbm_to_vmem [thread:$0]  %s24, 4096, %s26, [#allocation3], 2048, 2048, 128
    $region9: #{tpu_custom_call.1} parent=1 // pred_fallthru
      _
    // Predicated region
    $region10: #{tpu_custom_call.1} parent=1 // pred_check
      _
    $region11: #{tpu_custom_call.1} parent=1 // pred_check_branch
      %33 = sbr.rel (0) target = $region13
    $region12: #{tpu_custom_call.1} parent=1 // pred_region
      %35 = dma.done [#allocation5], 16
    $region13: #{tpu_custom_call.1} parent=1 // pred_fallthru
      _
    // Predicated region
    $region14: #{tpu_custom_call.1} parent=1 // pred_check
      _
    $region15: #{tpu_custom_call.1} parent=1 // pred_check_branch
      %37 = sbr.rel (0) target = $region17
    $region16: #{tpu_custom_call.1} parent=1 // pred_region
      %39 = dma.done [#allocation3], 4096
    $region17: #{tpu_custom_call.1} parent=1 // pred_fallthru
      _
    %40 = sfence
    %s41 = sld [smem:[#allocation2]]
    %s42 = sld [smem:[#allocation2 + $0x1]]
    %v43 = vld [vmem:[#allocation6] sm:$0xff]
    %v44 = vld [vmem:[#allocation6 + $0x8] sm:$0xff]
    %v45 = vld [vmem:[#allocation6 + $0x10] sm:$0xff]
    %v46 = vld [vmem:[#allocation6 + $0x18] sm:$0xff]
    %v47 = vld [vmem:[#allocation6 + $0x20] sm:$0xff]
    %v48 = vld [vmem:[#allocation6 + $0x28] sm:$0xff]
    %v49 = vld [vmem:[#allocation6 + $0x30] sm:$0xff]
    %v50 = vld [vmem:[#allocation6 + $0x38] sm:$0xff]
    %v51 = vld [vmem:[#allocation6 + $0x40] sm:$0xff]
    %v52 = vld [vmem:[#allocation6 + $0x48] sm:$0xff]
    %v53 = vld [vmem:[#allocation6 + $0x50] sm:$0xff]
    %v54 = vld [vmem:[#allocation6 + $0x58] sm:$0xff]
    %v55 = vld [vmem:[#allocation6 + $0x60] sm:$0xff]
    %v56 = vld [vmem:[#allocation6 + $0x68] sm:$0xff]
    %v57 = vld [vmem:[#allocation6 + $0x70] sm:$0xff]
    %v58 = vld [vmem:[#allocation6 + $0x78] sm:$0xff]
    %v59 = vld [vmem:[#allocation6 + $0x80] sm:$0xff]
    %v60 = vld [vmem:[#allocation6 + $0x88] sm:$0xff]
    %v61 = vld [vmem:[#allocation6 + $0x90] sm:$0xff]
    %v62 = vld [vmem:[#allocation6 + $0x98] sm:$0xff]
    %v63 = vld [vmem:[#allocation6 + $0xa0] sm:$0xff]
    %v64 = vld [vmem:[#allocation6 + $0xa8] sm:$0xff]
    %v65 = vld [vmem:[#allocation6 + $0xb0] sm:$0xff]
    %v66 = vld [vmem:[#allocation6 + $0xb8] sm:$0xff]
    %v67 = vld [vmem:[#allocation6 + $0xc0] sm:$0xff]
    %v68 = vld [vmem:[#allocation6 + $0xc8] sm:$0xff]
    %v69 = vld [vmem:[#allocation6 + $0xd0] sm:$0xff]
    %v70 = vld [vmem:[#allocation6 + $0xd8] sm:$0xff]
    %v71 = vld [vmem:[#allocation6 + $0xe0] sm:$0xff]
    %v72 = vld [vmem:[#allocation6 + $0xe8] sm:$0xff]
    %v73 = vld [vmem:[#allocation6 + $0xf0] sm:$0xff]
    %v74 = vld [vmem:[#allocation6 + $0xf8] sm:$0xff]
    %v75 = vstv %s41
    %v76 = vmul.f32 %v43, %v75
    %v77 = vmul.f32 %v44, %v75
    %v78 = vmul.f32 %v45, %v75
    %v79 = vmul.f32 %v46, %v75
    %v80 = vmul.f32 %v47, %v75
    %v81 = vmul.f32 %v48, %v75
    %v82 = vmul.f32 %v49, %v75
    %v83 = vmul.f32 %v50, %v75
    %v84 = vmul.f32 %v51, %v75
    %v85 = vmul.f32 %v52, %v75
    %v86 = vmul.f32 %v53, %v75
    %v87 = vmul.f32 %v54, %v75
    %v88 = vmul.f32 %v55, %v75
    %v89 = vmul.f32 %v56, %v75
    %v90 = vmul.f32 %v57, %v75
    %v91 = vmul.f32 %v58, %v75
    %v92 = vmul.f32 %v59, %v75
    %v93 = vmul.f32 %v60, %v75
    %v94 = vmul.f32 %v61, %v75
    %v95 = vmul.f32 %v62, %v75
    %v96 = vmul.f32 %v63, %v75
    %v97 = vmul.f32 %v64, %v75
    %v98 = vmul.f32 %v65, %v75
    %v99 = vmul.f32 %v66, %v75
    %v100 = vmul.f32 %v67, %v75
    %v101 = vmul.f32 %v68, %v75
    %v102 = vmul.f32 %v69, %v75
    %v103 = vmul.f32 %v70, %v75
    %v104 = vmul.f32 %v71, %v75
    %v105 = vmul.f32 %v72, %v75
    %v106 = vmul.f32 %v73, %v75
    %v107 = vmul.f32 %v74, %v75
    %v108 = vstv %s42
    %v109 = vadd.f32 %v76, %v108
    %v110 = vadd.f32 %v77, %v108
    %v111 = vadd.f32 %v78, %v108
    %v112 = vadd.f32 %v79, %v108
    %v113 = vadd.f32 %v80, %v108
    %v114 = vadd.f32 %v81, %v108
    %v115 = vadd.f32 %v82, %v108
    %v116 = vadd.f32 %v83, %v108
    %v117 = vadd.f32 %v84, %v108
    %v118 = vadd.f32 %v85, %v108
    %v119 = vadd.f32 %v86, %v108
    %v120 = vadd.f32 %v87, %v108
    %v121 = vadd.f32 %v88, %v108
    %v122 = vadd.f32 %v89, %v108
    %v123 = vadd.f32 %v90, %v108
    %v124 = vadd.f32 %v91, %v108
    %v125 = vadd.f32 %v92, %v108
    %v126 = vadd.f32 %v93, %v108
    %v127 = vadd.f32 %v94, %v108
    %v128 = vadd.f32 %v95, %v108
    %v129 = vadd.f32 %v96, %v108
    %v130 = vadd.f32 %v97, %v108
    %v131 = vadd.f32 %v98, %v108
    %v132 = vadd.f32 %v99, %v108
    %v133 = vadd.f32 %v100, %v108
    %v134 = vadd.f32 %v101, %v108
    %v135 = vadd.f32 %v102, %v108
    %v136 = vadd.f32 %v103, %v108
    %v137 = vadd.f32 %v104, %v108
    %v138 = vadd.f32 %v105, %v108
    %v139 = vadd.f32 %v106, %v108
    %v140 = vadd.f32 %v107, %v108
    %v141 = vtanh.pop %v109
    %v142 = vtanh.pop %v110
    %v143 = vtanh.pop %v111
    %v144 = vtanh.pop %v112
    %v145 = vtanh.pop %v113
    %v146 = vtanh.pop %v114
    %v147 = vtanh.pop %v115
    %v148 = vtanh.pop %v116
    %v149 = vtanh.pop %v117
    %v150 = vtanh.pop %v118
    %v151 = vtanh.pop %v119
    %v152 = vtanh.pop %v120
    %v153 = vtanh.pop %v121
    %v154 = vtanh.pop %v122
    %v155 = vtanh.pop %v123
    %v156 = vtanh.pop %v124
    %v157 = vtanh.pop %v125
    %v158 = vtanh.pop %v126
    %v159 = vtanh.pop %v127
    %v160 = vtanh.pop %v128
    %v161 = vtanh.pop %v129
    %v162 = vtanh.pop %v130
    %v163 = vtanh.pop %v131
    %v164 = vtanh.pop %v132
    %v165 = vtanh.pop %v133
    %v166 = vtanh.pop %v134
    %v167 = vtanh.pop %v135
    %v168 = vtanh.pop %v136
    %v169 = vtanh.pop %v137
    %v170 = vtanh.pop %v138
    %v171 = vtanh.pop %v139
    %v172 = vtanh.pop %v140
    %173 = vst [vmem:[#allocation7] sm:$0xff] %v141
    %174 = vst [vmem:[#allocation7 + $0x8] sm:$0xff] %v142
    %175 = vst [vmem:[#allocation7 + $0x10] sm:$0xff] %v143
    %176 = vst [vmem:[#allocation7 + $0x18] sm:$0xff] %v144
    %177 = vst [vmem:[#allocation7 + $0x20] sm:$0xff] %v145
    %178 = vst [vmem:[#allocation7 + $0x28] sm:$0xff] %v146
    %179 = vst [vmem:[#allocation7 + $0x30] sm:$0xff] %v147
    %180 = vst [vmem:[#allocation7 + $0x38] sm:$0xff] %v148
    %181 = vst [vmem:[#allocation7 + $0x40] sm:$0xff] %v149
    %182 = vst [vmem:[#allocation7 + $0x48] sm:$0xff] %v150
    %183 = vst [vmem:[#allocation7 + $0x50] sm:$0xff] %v151
    %184 = vst [vmem:[#allocation7 + $0x58] sm:$0xff] %v152
    %185 = vst [vmem:[#allocation7 + $0x60] sm:$0xff] %v153
    %186 = vst [vmem:[#allocation7 + $0x68] sm:$0xff] %v154
    %187 = vst [vmem:[#allocation7 + $0x70] sm:$0xff] %v155
    %188 = vst [vmem:[#allocation7 + $0x78] sm:$0xff] %v156
    %189 = vst [vmem:[#allocation7 + $0x80] sm:$0xff] %v157
    %190 = vst [vmem:[#allocation7 + $0x88] sm:$0xff] %v158
    %191 = vst [vmem:[#allocation7 + $0x90] sm:$0xff] %v159
    %192 = vst [vmem:[#allocation7 + $0x98] sm:$0xff] %v160
    %193 = vst [vmem:[#allocation7 + $0xa0] sm:$0xff] %v161
    %194 = vst [vmem:[#allocation7 + $0xa8] sm:$0xff] %v162
    %195 = vst [vmem:[#allocation7 + $0xb0] sm:$0xff] %v163
    %196 = vst [vmem:[#allocation7 + $0xb8] sm:$0xff] %v164
    %197 = vst [vmem:[#allocation7 + $0xc0] sm:$0xff] %v165
    %198 = vst [vmem:[#allocation7 + $0xc8] sm:$0xff] %v166
    %199 = vst [vmem:[#allocation7 + $0xd0] sm:$0xff] %v167
    %200 = vst [vmem:[#allocation7 + $0xd8] sm:$0xff] %v168
    %201 = vst [vmem:[#allocation7 + $0xe0] sm:$0xff] %v169
    %202 = vst [vmem:[#allocation7 + $0xe8] sm:$0xff] %v170
    %203 = vst [vmem:[#allocation7 + $0xf0] sm:$0xff] %v171
    %204 = vst [vmem:[#allocation7 + $0xf8] sm:$0xff] %v172
    // Predicated region
    $region18: #{tpu_custom_call.1} parent=1 // pred_check
      _
    $region19: #{tpu_custom_call.1} parent=1 // pred_check_branch
      %206 = sbr.rel (0) target = $region21
    $region20: #{tpu_custom_call.1} parent=1 // pred_region
      %208 = vsyncadd [#allocation4], 0
      %s209 = sshll.u32 [#allocation7], 4
      %s210 = int_to_ptr.vmem [resolvable:$true] %s209
      %s211 = sshll.u32 %s2, 4
      %s212 = int_to_ptr.hbm [resolvable:$true] %s211
      %217 = dma.vmem_to_hbm [thread:$0]  %s210, 4096, %s212, [#allocation4], 2048, 2048, 128
    $region21: #{tpu_custom_call.1} parent=1 // pred_fallthru
      _
    // Predicated region
    $region22: #{tpu_custom_call.1} parent=1 // pred_check
      _
    $region23: #{tpu_custom_call.1} parent=1 // pred_check_branch
      %219 = sbr.rel (0) target = $region25
    $region24: #{tpu_custom_call.1} parent=1 // pred_region
      %221 = dma.done [#allocation4], 4096
    $region25: #{tpu_custom_call.1} parent=1 // pred_fallthru
      _
    %222 = vsyncpa [#allocation3], 1
    %223 = vsyncpa [#allocation4], 1
    %224 = vsyncpa [#allocation5], 1

</llo_original>
